<compile_context>
chip_gen: v6e
topology: v6e:2x2x1
jax: 0.10.0
libtpu: 0.0.40
codegen_flags: <defaults>
</compile_context>

<pallas_src>
import functools

import jax
import jax.numpy as jnp
from jax.experimental import pallas as pl
from jax.experimental.pallas import tpu as pltpu


def _tce_loss_kernel(logits_ref, classes_ref, out_ref, m_ref, l_ref, t_ref, *,
                     pad_idx, n_rows, tile_n, tile_h):
    i = pl.program_id(0)          # row-block index ("parallel")
    h = pl.program_id(1)          # H-chunk index   ("arbitrary", reduction)
    num_h = pl.num_programs(1)

    @pl.when(h == 0)
    def _():
        m_ref[...] = jnp.full_like(m_ref, -jnp.inf)
        l_ref[...] = jnp.zeros_like(l_ref)
        t_ref[...] = jnp.zeros_like(t_ref)

    x = logits_ref[...]                                   # (tile_n, tile_h), native dtype
    tgt = classes_ref[...]                                # (tile_n, 1) int32

    # Row max on the native dtype (exact; upcast only the per-row scalar).
    chunk_max = jnp.max(x, axis=-1, keepdims=True).astype(jnp.float32)
    m_old = m_ref[...]
    m_new = jnp.maximum(m_old, chunk_max)

    # exp pass: single fused f32 cast (no standalone f32 copy of the block).
    p = jnp.exp(x.astype(jnp.float32) - m_new)
    l_ref[...] = l_ref[...] * jnp.exp(m_old - m_new) + jnp.sum(
        p, axis=-1, keepdims=True)
    m_ref[...] = m_new

    # Target-logit gather via one-hot compare on the native-dtype block.
    # NOTE: targets must lie in [0, H) unless they equal pad_idx; out-of-range
    # non-pad targets silently contribute tgt_logit = 0.
    col = jax.lax.broadcasted_iota(jnp.int32, x.shape, 1) + h * tile_h
    onehot = col == tgt
    # Only one column per row can match, so the native-dtype select + sum is
    # exact; upcast the per-row result only.
    t_ref[...] += jnp.sum(jnp.where(onehot, x, jnp.zeros_like(x)),
                          axis=-1, keepdims=True).astype(jnp.float32)

    @pl.when(h == num_h - 1)
    def _():
        # Mask pad targets (ignore_index) and rows past the end of the array
        # (remainder-tile padding).  Keep this a *select*, not a multiply, so
        # inf/NaN from garbage padding rows is discarded, not propagated.
        row = jax.lax.broadcasted_iota(jnp.int32, tgt.shape, 0) + i * tile_n
        valid = (tgt != pad_idx) & (row < n_rows)
        loss = m_ref[...] + jnp.log(l_ref[...]) - t_ref[...]     # (tile_n, 1)
        out_ref[...] = jnp.sum(jnp.where(valid, loss, 0.0)).reshape(1, 1, 1)


def _vmem_capacity_bytes():
    try:
        return int(pltpu.get_tpu_info().vmem_capacity_bytes)
    except Exception:
        return 64 * 1024 * 1024   # conservative fallback (v7x per-TC VMEM)


def _pick_tile_h(H, bpe, budget, min_rows=512):
    """Full-H rows unless an even, lane-aligned split is needed so row tiles
    can stay at least ~min_rows tall (vocab-scale H)."""
    tile_h = H
    while (tile_h % 2 == 0 and (tile_h // 2) % 128 == 0
           and tile_h * min_rows * bpe > budget):
        tile_h //= 2
    return tile_h


def tce_loss(logits, classes, *, pad_idx=1, tile_n=None, tile_h=None):
    """Equivalent of TCELoss.forward: logits (T, B, H), classes (B, T)."""
    T, B, H = logits.shape
    assert classes.shape == (B, T)
    N = T * B

    # Keep logits in (T, B) row order (free contiguous reshape); flatten the
    # tiny classes array in the SAME (T, B) order.
    x = logits.reshape(N, H)
    tgt = jnp.transpose(classes, (1, 0)).reshape(N, 1).astype(jnp.int32)

    itemsize = jnp.dtype(x.dtype).itemsize
    # Per-element VMEM footprint: double-buffered native-dtype input block
    # plus the fused f32 exp-pass temporaries (~2 x 4 B).
    bpe = 2 * itemsize + 8

    vmem_cap = _vmem_capacity_bytes()
    usable = (vmem_cap * 3) // 4                 # headroom below physical VMEM
    budget = max(usable - (2 << 20), 4 << 20)    # slack for classes/scratch

    if tile_h is None:
        tile_h = _pick_tile_h(H, bpe, budget)
    assert tile_h == H or (H % tile_h == 0 and tile_h % 128 == 0), (
        "tile_h must equal H or be a lane-aligned divisor of H")
    num_h = H // tile_h

    if tile_n is None:
        tile_n = budget // (tile_h * bpe)
    # Row-aligned, capped at 8192 rows, and capped at ~N/2 so the "parallel"
    # row axis yields >= 2 balanced blocks (both TensorCores busy on v7x).
    half = ((pl.cdiv(N, 2) + 7) // 8) * 8
    tile_n = max(8, min((tile_n // 8) * 8, 8192, half))

    num_blocks = pl.cdiv(N, tile_n)

    need = (tile_n * tile_h * bpe            # input double-buffer + f32 temps
            + 2 * tile_n * 4                 # classes double-buffer
            + 3 * tile_n * 4                 # m / l / t scratch
            + (2 << 20))                     # slack
    vmem_limit = int(max(32 << 20, min(usable, need)))

    cost = pl.CostEstimate(
        flops=int(5 * N * H),
        transcendentals=int(N * H),
        bytes_accessed=int(N * H * itemsize + N * 4 + num_blocks * 4),
    )

    out = pl.pallas_call(
        functools.partial(_tce_loss_kernel, pad_idx=pad_idx, n_rows=N,
                          tile_n=tile_n, tile_h=tile_h),
        out_shape=jax.ShapeDtypeStruct((num_blocks, 1, 1), jnp.float32),
        grid_spec=pltpu.PrefetchScalarGridSpec(
            num_scalar_prefetch=0,
            grid=(num_blocks, num_h),
            in_specs=[
                pl.BlockSpec((tile_n, tile_h), lambda i, h: (i, h)),
                pl.BlockSpec((tile_n, 1), lambda i, h: (i, 0)),
            ],
            out_specs=pl.BlockSpec((1, 1, 1), lambda i, h: (i, 0, 0)),
            scratch_shapes=[
                pltpu.VMEM((tile_n, 1), jnp.float32),   # running max m
                pltpu.VMEM((tile_n, 1), jnp.float32),   # running sum-exp l
                pltpu.VMEM((tile_n, 1), jnp.float32),   # target logit
            ],
        ),
        compiler_params=pltpu.CompilerParams(
            dimension_semantics=("parallel", "arbitrary"),
            vmem_limit_bytes=vmem_limit,
        ),
        cost_estimate=cost,
    )(x, tgt)
    return jnp.sum(out)


def _reference_tce_loss(logits, classes, pad_idx=1):
    T, B, H = logits.shape
    x = jnp.transpose(logits, (1, 0, 2)).reshape(B * T, H).astype(jnp.float32)
    tgt = classes.reshape(-1).astype(jnp.int32)
    lse = jax.nn.logsumexp(x, axis=-1)
    tgt_logit = jnp.take_along_axis(x, tgt[:, None], axis=-1)[:, 0]
    nll = lse - tgt_logit
    return jnp.sum(jnp.where(tgt != pad_idx, nll, 0.0))


if __name__ == "__main__":
    # dictionary.pad() (fairseq convention) -> pad index 1
    PAD_IDX = 1

    key = jax.random.PRNGKey(0)

    # Case 1: the module-sized example (T=8, B=2, H=32).
    T, B, H = 8, 2, 32
    k_logits, k_classes, k_mask, key = jax.random.split(key, 4)
    logits = jax.random.normal(k_logits, (T, B, H), dtype=jnp.float32)
    classes = jax.random.randint(k_classes, (B, T), 0, H, dtype=jnp.int32)
    pad_mask = jax.random.bernoulli(k_mask, 0.25, (B, T))
    classes = jnp.where(pad_mask, PAD_IDX, classes)

    loss = jax.block_until_ready(tce_loss(logits, classes, pad_idx=PAD_IDX))
    ref = _reference_tce_loss(logits, classes, pad_idx=PAD_IDX)
    assert jnp.allclose(loss, ref, rtol=1e-5, atol=1e-5), (loss, ref)

    # Case 2: N not a multiple of tile_n (remainder masking + multiple
    # parallel partial-sum blocks).
    T2, B2, H2 = 5, 3, 32
    k_logits, k_classes, k_mask, key = jax.random.split(key, 4)
    logits2 = jax.random.normal(k_logits, (T2, B2, H2), dtype=jnp.float32)
    classes2 = jax.random.randint(k_classes, (B2, T2), 0, H2, dtype=jnp.int32)
    pad_mask2 = jax.random.bernoulli(k_mask, 0.25, (B2, T2))
    classes2 = jnp.where(pad_mask2, PAD_IDX, classes2)

    loss2 = jax.block_until_ready(
        tce_loss(logits2, classes2, pad_idx=PAD_IDX, tile_n=8))
    ref2 = _reference_tce_loss(logits2, classes2, pad_idx=PAD_IDX)
    assert jnp.allclose(loss2, ref2, rtol=1e-5, atol=1e-5), (loss2, ref2)

    # Case 3: exercises the inner H-chunk (online logsumexp) path explicitly.
    T3, B3, H3 = 8, 2, 512
    k_logits, k_classes, k_mask, key = jax.random.split(key, 4)
    logits3 = jax.random.normal(k_logits, (T3, B3, H3), dtype=jnp.float32)
    classes3 = jax.random.randint(k_classes, (B3, T3), 0, H3, dtype=jnp.int32)
    pad_mask3 = jax.random.bernoulli(k_mask, 0.25, (B3, T3))
    classes3 = jnp.where(pad_mask3, PAD_IDX, classes3)

    loss3 = jax.block_until_ready(
        tce_loss(logits3, classes3, pad_idx=PAD_IDX, tile_n=8, tile_h=256))
    ref3 = _reference_tce_loss(logits3, classes3, pad_idx=PAD_IDX)
    assert jnp.allclose(loss3, ref3, rtol=1e-5, atol=1e-5), (loss3, ref3)

    print("KERNEL_OK")
</pallas_src>

<mosaic_0001>
module attributes {stable_mosaic.version = 11 : i64} {
  func.func @_tce_loss_kernel(%arg0: i32, %arg1: i32, %arg2: memref<8x32xf32, #tpu.memory_space<vmem>>, %arg3: memref<8x1xi32, #tpu.memory_space<vmem>>, %arg4: memref<1x1x1xf32, #tpu.memory_space<vmem>>, %arg5: memref<8x1xf32, #tpu.memory_space<vmem>>, %arg6: memref<8x1xf32, #tpu.memory_space<vmem>>, %arg7: memref<8x1xf32, #tpu.memory_space<vmem>>) attributes {dimension_semantics = [#tpu.dimension_semantics<parallel>, #tpu.dimension_semantics<arbitrary>], iteration_bounds = array<i64: 2, 1>, scalar_prefetch = 0 : i64, scratch_operands = 3 : i64, tpu.core_type = #tpu.core_type<tc>, window_params = [{transform_indices = @transform_0, window_bounds = array<i64: 8, 32>}, {transform_indices = @transform_1, window_bounds = array<i64: 8, 1>}, {transform_indices = @transform_2, window_bounds = array<i64: 1, 1, 1>}]} {
    %c0_i32 = arith.constant 0 : i32
    %0 = arith.cmpi eq, %arg1, %c0_i32 : i32
    %1 = arith.extui %0 : i1 to i32
    %c0_i32_0 = arith.constant 0 : i32
    %2 = arith.cmpi ne, %1, %c0_i32_0 : i32
    scf.if %2 {
      %cst_21 = arith.constant 0xFF800000 : f32
      %37 = vector.broadcast %cst_21 : f32 to vector<8x1xf32>
      %c0_22 = arith.constant 0 : index
      %c0_23 = arith.constant 0 : index
      %38 = vector.load %arg5[%c0_22, %c0_23] : memref<8x1xf32, #tpu.memory_space<vmem>>, vector<8x1xf32>
      tpu.vector_store %arg5[%c0_22, %c0_23], %37 {strides = array<i32>} : memref<8x1xf32, #tpu.memory_space<vmem>>, vector<8x1xf32>,
      %cst_24 = arith.constant 0.000000e+00 : f32
      %39 = vector.broadcast %cst_24 : f32 to vector<8x1xf32>
      %c0_25 = arith.constant 0 : index
      %c0_26 = arith.constant 0 : index
      %40 = vector.load %arg6[%c0_25, %c0_26] : memref<8x1xf32, #tpu.memory_space<vmem>>, vector<8x1xf32>
      tpu.vector_store %arg6[%c0_25, %c0_26], %39 {strides = array<i32>} : memref<8x1xf32, #tpu.memory_space<vmem>>, vector<8x1xf32>,
      %cst_27 = arith.constant 0.000000e+00 : f32
      %41 = vector.broadcast %cst_27 : f32 to vector<8x1xf32>
      %c0_28 = arith.constant 0 : index
      %c0_29 = arith.constant 0 : index
      %42 = vector.load %arg7[%c0_28, %c0_29] : memref<8x1xf32, #tpu.memory_space<vmem>>, vector<8x1xf32>
      tpu.vector_store %arg7[%c0_28, %c0_29], %41 {strides = array<i32>} : memref<8x1xf32, #tpu.memory_space<vmem>>, vector<8x1xf32>,
    } else {
    }
    %c0 = arith.constant 0 : index
    %c0_1 = arith.constant 0 : index
    %3 = vector.load %arg2[%c0, %c0_1] : memref<8x32xf32, #tpu.memory_space<vmem>>, vector<8x32xf32>
    %c0_2 = arith.constant 0 : index
    %c0_3 = arith.constant 0 : index
    %4 = vector.load %arg3[%c0_2, %c0_3] : memref<8x1xi32, #tpu.memory_space<vmem>>, vector<8x1xi32>
    %cst = arith.constant dense<0xFF800000> : vector<8xf32>
    %5 = vector.multi_reduction <maximumf>, %3, %cst [1] : vector<8x32xf32> to vector<8xf32>
    %6 = vector.shape_cast %5 : vector<8xf32> to vector<8x1xf32>
    %c0_4 = arith.constant 0 : index
    %c0_5 = arith.constant 0 : index
    %7 = vector.load %arg5[%c0_4, %c0_5] : memref<8x1xf32, #tpu.memory_space<vmem>>, vector<8x1xf32>
    %8 = arith.maximumf %7, %6 : vector<8x1xf32>
    %9 = vector.broadcast %8 : vector<8x1xf32> to vector<8x32xf32>
    %10 = arith.subf %3, %9 : vector<8x32xf32>
    %11 = math.exp %10 : vector<8x32xf32>
    %c0_6 = arith.constant 0 : index
    %c0_7 = arith.constant 0 : index
    %12 = vector.load %arg6[%c0_6, %c0_7] : memref<8x1xf32, #tpu.memory_space<vmem>>, vector<8x1xf32>
    %13 = arith.subf %7, %8 : vector<8x1xf32>
    %14 = math.exp %13 : vector<8x1xf32>
    %15 = arith.mulf %12, %14 : vector<8x1xf32>
    %cst_8 = arith.constant dense<0.000000e+00> : vector<8xf32>
    %16 = vector.multi_reduction <add>, %11, %cst_8 [1] : vector<8x32xf32> to vector<8xf32>
    %17 = vector.shape_cast %16 : vector<8xf32> to vector<8x1xf32>
    %18 = arith.addf %15, %17 : vector<8x1xf32>
    %c0_9 = arith.constant 0 : index
    %c0_10 = arith.constant 0 : index
    %19 = vector.load %arg6[%c0_9, %c0_10] : memref<8x1xf32, #tpu.memory_space<vmem>>, vector<8x1xf32>
    tpu.vector_store %arg6[%c0_9, %c0_10], %18 {strides = array<i32>} : memref<8x1xf32, #tpu.memory_space<vmem>>, vector<8x1xf32>,
    %c0_11 = arith.constant 0 : index
    %c0_12 = arith.constant 0 : index
    %20 = vector.load %arg5[%c0_11, %c0_12] : memref<8x1xf32, #tpu.memory_space<vmem>>, vector<8x1xf32>
    tpu.vector_store %arg5[%c0_11, %c0_12], %8 {strides = array<i32>} : memref<8x1xf32, #tpu.memory_space<vmem>>, vector<8x1xf32>,
    %21 = tpu.iota {dimensions = array<i32: 1>} : vector<8x32xi32>
    %c32_i32 = arith.constant 32 : i32
    %22 = arith.muli %arg1, %c32_i32 : i32
    %23 = vector.broadcast %22 : i32 to vector<8x32xi32>
    %24 = arith.addi %21, %23 : vector<8x32xi32>
    %25 = vector.broadcast %4 : vector<8x1xi32> to vector<8x32xi32>
    %26 = arith.cmpi eq, %24, %25 : vector<8x32xi32>
    %c0_13 = arith.constant 0 : index
    %c0_14 = arith.constant 0 : index
    %27 = vector.load %arg7[%c0_13, %c0_14] : memref<8x1xf32, #tpu.memory_space<vmem>>, vector<8x1xf32>
    %cst_15 = arith.constant 0.000000e+00 : f32
    %28 = vector.broadcast %cst_15 : f32 to vector<8x32xf32>
    %29 = arith.select %26, %3, %28 : vector<8x32xi1>, vector<8x32xf32>
    %cst_16 = arith.constant dense<0.000000e+00> : vector<8xf32>
    %30 = vector.multi_reduction <add>, %29, %cst_16 [1] : vector<8x32xf32> to vector<8xf32>
    %31 = vector.shape_cast %30 : vector<8xf32> to vector<8x1xf32>
    %32 = arith.addf %27, %31 : vector<8x1xf32>
    %c0_17 = arith.constant 0 : index
    %c0_18 = arith.constant 0 : index
    %33 = vector.load %arg7[%c0_17, %c0_18] : memref<8x1xf32, #tpu.memory_space<vmem>>, vector<8x1xf32>
    tpu.vector_store %arg7[%c0_17, %c0_18], %32 {strides = array<i32>} : memref<8x1xf32, #tpu.memory_space<vmem>>, vector<8x1xf32>,
    %c0_i32_19 = arith.constant 0 : i32
    %34 = arith.cmpi eq, %arg1, %c0_i32_19 : i32
    %35 = arith.extui %34 : i1 to i32
    %c0_i32_20 = arith.constant 0 : i32
    %36 = arith.cmpi ne, %35, %c0_i32_20 : i32
    scf.if %36 {
      %37 = tpu.iota {dimensions = array<i32: 0>} : vector<8x1xi32>
      %c8_i32 = arith.constant 8 : i32
      %38 = arith.muli %arg0, %c8_i32 : i32
      %39 = vector.broadcast %38 : i32 to vector<8x1xi32>
      %40 = arith.addi %37, %39 : vector<8x1xi32>
      %c1_i32 = arith.constant 1 : i32
      %41 = vector.broadcast %c1_i32 : i32 to vector<8x1xi32>
      %42 = arith.cmpi ne, %4, %41 : vector<8x1xi32>
      %c16_i32 = arith.constant 16 : i32
      %43 = vector.broadcast %c16_i32 : i32 to vector<8x1xi32>
      %44 = arith.cmpi slt, %40, %43 : vector<8x1xi32>
      %45 = arith.andi %42, %44 : vector<8x1xi1>
      %c0_21 = arith.constant 0 : index
      %c0_22 = arith.constant 0 : index
      %46 = vector.load %arg5[%c0_21, %c0_22] : memref<8x1xf32, #tpu.memory_space<vmem>>, vector<8x1xf32>
      %c0_23 = arith.constant 0 : index
      %c0_24 = arith.constant 0 : index
      %47 = vector.load %arg6[%c0_23, %c0_24] : memref<8x1xf32, #tpu.memory_space<vmem>>, vector<8x1xf32>
      %48 = math.log %47 : vector<8x1xf32>
      %49 = arith.addf %46, %48 : vector<8x1xf32>
      %c0_25 = arith.constant 0 : index
      %c0_26 = arith.constant 0 : index
      %50 = vector.load %arg7[%c0_25, %c0_26] : memref<8x1xf32, #tpu.memory_space<vmem>>, vector<8x1xf32>
      %51 = arith.subf %49, %50 : vector<8x1xf32>
      %cst_27 = arith.constant 0.000000e+00 : f32
      %52 = vector.broadcast %cst_27 : f32 to vector<8x1xf32>
      %53 = arith.select %45, %51, %52 : vector<8x1xi1>, vector<8x1xf32>
      %54 = vector.shape_cast %53 : vector<8x1xf32> to vector<1x8x1xf32>
      %cst_28 = arith.constant dense<0.000000e+00> : vector<1xf32>
      %55 = vector.multi_reduction <add>, %54, %cst_28 [1, 2] : vector<1x8x1xf32> to vector<1xf32>
      %56 = vector.shape_cast %55 : vector<1xf32> to vector<1x1x1xf32>
      %57 = vector.extract %56[0, 0, 0] : f32 from vector<1x1x1xf32>
      %58 = vector.broadcast %57 : f32 to vector<1x1x1xf32>
      %c0_29 = arith.constant 0 : index
      %c0_30 = arith.constant 0 : index
      %c0_31 = arith.constant 0 : index
      %59 = vector.load %arg4[%c0_29, %c0_30, %c0_31] : memref<1x1x1xf32, #tpu.memory_space<vmem>>, vector<1x1x1xf32>
      tpu.vector_store %arg4[%c0_29, %c0_30, %c0_31], %58 {strides = array<i32>} : memref<1x1x1xf32, #tpu.memory_space<vmem>>, vector<1x1x1xf32>,
    } else {
    }
    return
  }
  func.func @transform_0(%arg0: i32, %arg1: i32) -> (i32, i32) {
    %c0_i32 = arith.constant 0 : i32
    return %arg0, %arg1 : i32, i32
  }
  func.func @transform_1(%arg0: i32, %arg1: i32) -> (i32, i32) {
    %c0_i32 = arith.constant 0 : i32
    %c0_i32_0 = arith.constant 0 : i32
    return %arg0, %c0_i32 : i32, i32
  }
  func.func @transform_2(%arg0: i32, %arg1: i32) -> (i32, i32, i32) {
    %c0_i32 = arith.constant 0 : i32
    %c0_i32_0 = arith.constant 0 : i32
    %c0_i32_1 = arith.constant 0 : i32
    return %arg0, %c0_i32, %c0_i32_0 : i32, i32, i32
  }
}

</mosaic_0001>

<llo_original>
// kernel: tpu_custom_call.1
$region0: #{tpu_custom_call.1}
  #allocation0 [shape = 'u32[]', space=smem, size = 0x4, offset = 0x4, fixed_abs, tag = 'smem constant byte address 0x4 - core index']
  #allocation1 [shape = 'u32[144,128]{1,0:T(1,128)}', space=vmem, size = 0x12000, scoped, tag = 'internal scratch']
  #allocation2 [shape = 'f32[8,1]{1,0:T(8,128)}', space=vmem, size = 0x1000, scoped, tag = 'scratch operand']
  #allocation3 [shape = 'f32[8,1]{1,0:T(8,128)}', space=vmem, size = 0x1000, scoped, tag = 'scratch operand']
  #allocation4 [shape = 'f32[8,1]{1,0:T(8,128)}', space=vmem, size = 0x1000, scoped, tag = 'scratch operand']
  %s0 = inlined_call_operand.vmem [shape: f32[16,32], index: 0, kind: input, shape index: {}]
  %s1 = inlined_call_operand.vmem [shape: s32[16,1], index: 1, kind: input, shape index: {}]
  %s2 = inlined_call_operand.vmem [shape: f32[2,1,1], index: 2, kind: output, shape index: {}]
  %s3 = sld [smem:[#allocation0]]
  $region49: #{tpu_custom_call.1} parent=0
    _
  %s5 = ssub.s32 1, %s3
  %s6 = scalar_select 0, %s5, %s3
  loop: start=0, step=1, limit=4
  $region2: #{tpu_custom_call.1} parent=0 // loop_pre_header
    _
  $region3: #{tpu_custom_call.1} parent=0 // loop_header
    %s8 = sphi 0, %s12
    %p9 = scmp.ge.s32.totalorder %s8, 4
    %s15 = sphi 0, %s27
    %s16 = sphi 0, %s23
    %s17 = sphi 0, %s15
    %s18 = sphi 0, %s16
    %s19 = sphi 0, %s17
    %s20 = sphi 0, %s18
    %s32 = sphi 0, %s34
    %s35 = sphi 0, %s32
    %s36 = sphi 0, %s35
    %s52 = sphi 0, %s36
    %s58 = sphi 0, %s60
    %s61 = sphi 0, %s58
    %s62 = sphi 0, %s61
    %s78 = sphi 0, %s62
    %s84 = sphi 0, %s86
    %s87 = sphi 0, %s84
    %s88 = sphi 0, %s87
    %s104 = sphi 0, %s88
  $region4: #{tpu_custom_call.1} parent=0 // loop_header_branch
    %11 = sbr.rel (%p9) target = $region8
  $region5: #{tpu_custom_call.1} parent=0 // loop_body
    %s13 = ssub.s32 %s8, 1
    %s14 = ssub.s32 %s8, 2
    %s21 = sadd.s32 1, %s16
    %p22 = scmp.ge.s32.totalorder %s21, 1
    %s23 = scalar_select %p22, 0, %s21
    %s24 = sadd.s32 1, %s15
    %s25 = scalar_select %p22, %s24, %s15
    %p26 = scmp.ge.s32.totalorder %s25, 2
    %s27 = scalar_select %p26, 0, %s25
    %s28 = ssub.s32 %s15, %s27
    %s29 = ssub.s32 %s16, %s23
    %s30 = sor.u32 %s28, %s29
    %p31 = scmp.eq.s32.totalorder %s30, 0
    %s33 = sadd.s32 %s32, 1
    %s34 = scalar_select %p31, %s32, %s33
    %p37 = pneg %p31
    %p38 = scmp.eq.s32.totalorder %s8, 1
    %p39 = por %p37, %p38
    %p40 = scmp.ne.s32.totalorder %s32, %s35
    %p41 = scmp.eq.s32.totalorder %s8, 0
    %p42 = por %p40, %p41
    %p43 = scmp.ne.s32.totalorder %s32, %s35
    %p44 = scmp.eq.s32.totalorder %s13, 1
    %p45 = por %p43, %p44
    %p46 = scmp.ne.s32.totalorder %s35, %s36
    %p47 = scmp.eq.s32.totalorder %s13, 0
    %p48 = por %p46, %p47
    %p49 = scmp.ne.s32.totalorder %s35, %s36
    %p50 = scmp.eq.s32.totalorder %s14, 1
    %p51 = por %p49, %p50
    %p53 = scmp.ne.s32.totalorder %s36, %s52
    %p54 = scmp.eq.s32.totalorder %s14, 0
    %p55 = por %p53, %p54
    %s56 = ssub.s32 %s15, %s27
    %p57 = scmp.eq.s32.totalorder %s56, 0
    %s59 = sadd.s32 %s58, 1
    %s60 = scalar_select %p57, %s58, %s59
    %p63 = pneg %p57
    %p64 = scmp.eq.s32.totalorder %s8, 1
    %p65 = por %p63, %p64
    %p66 = scmp.ne.s32.totalorder %s58, %s61
    %p67 = scmp.eq.s32.totalorder %s8, 0
    %p68 = por %p66, %p67
    %p69 = scmp.ne.s32.totalorder %s58, %s61
    %p70 = scmp.eq.s32.totalorder %s13, 1
    %p71 = por %p69, %p70
    %p72 = scmp.ne.s32.totalorder %s61, %s62
    %p73 = scmp.eq.s32.totalorder %s13, 0
    %p74 = por %p72, %p73
    %p75 = scmp.ne.s32.totalorder %s61, %s62
    %p76 = scmp.eq.s32.totalorder %s14, 1
    %p77 = por %p75, %p76
    %p79 = scmp.ne.s32.totalorder %s62, %s78
    %p80 = scmp.eq.s32.totalorder %s14, 0
    %p81 = por %p79, %p80
    %s82 = ssub.s32 %s15, %s27
    %p83 = scmp.eq.s32.totalorder %s82, 0
    %s85 = sadd.s32 %s84, 1
    %s86 = scalar_select %p83, %s84, %s85
    %p89 = pneg %p83
    %p90 = scmp.eq.s32.totalorder %s8, 1
    %p91 = por %p89, %p90
    %p92 = scmp.ne.s32.totalorder %s84, %s87
    %p93 = scmp.eq.s32.totalorder %s8, 0
    %p94 = por %p92, %p93
    %p95 = scmp.ne.s32.totalorder %s84, %s87
    %p96 = scmp.eq.s32.totalorder %s13, 1
    %p97 = por %p95, %p96
    %p98 = scmp.ne.s32.totalorder %s87, %s88
    %p99 = scmp.eq.s32.totalorder %s13, 0
    %p100 = por %p98, %p99
    %p101 = scmp.ne.s32.totalorder %s87, %s88
    %p102 = scmp.eq.s32.totalorder %s14, 1
    %p103 = por %p101, %p102
    %p105 = scmp.ne.s32.totalorder %s88, %s104
    %p106 = scmp.eq.s32.totalorder %s14, 0
    %p107 = por %p105, %p106
    %p108 = scmp.le.s32.totalorder 1, %s8
    %p109 = scmp.lt.s32.totalorder %s8, 3
    %p110 = pnand %p108, %p109
    %p111 = pneg %p110
    // Predicated region
    $region9: #{tpu_custom_call.1} parent=5 // pred_check
      _
    $region10: #{tpu_custom_call.1} parent=5 // pred_check_branch
      %113 = sbr.rel (%p110) target = $region12
    $region11: #{tpu_custom_call.1} parent=5 // pred_region
      %s114 = ssub.s32 %s8, 1
    $region12: #{tpu_custom_call.1} parent=5 // pred_fallthru
      _
    %p115 = scmp.lt.s32.totalorder %s8, 2
    // Predicated region
    $region13: #{tpu_custom_call.1} parent=5 // pred_check
      %p116 = pneg %p115
    $region14: #{tpu_custom_call.1} parent=5 // pred_check_branch
      %118 = sbr.rel (%p116) target = $region16
    $region15: #{tpu_custom_call.1} parent=5 // pred_region
      // Predicated region
      $region17: #{tpu_custom_call.1} parent=15 // pred_check
        %p119 = pneg %p42
      $region18: #{tpu_custom_call.1} parent=15 // pred_check_branch
        %121 = sbr.rel (%p119) target = $region20
      $region19: #{tpu_custom_call.1} parent=15 // pred_region
        %p122 = scmp.lt.s32.totalorder %s15, 1
        %s123 = scalar_select %p122, %s15, 1
        %p124 = scmp.lt.s32.totalorder %s16, 0
        %s125 = scalar_select %p124, %s16, 0
        %s126 = sadd.s32 %s125, %s123
        %s127 = smul.addr %s126, 8
        %s128 = scalar_lea.vmem %s0, %s127
      $region20: #{tpu_custom_call.1} parent=15 // pred_fallthru
        _
      // Predicated region
      $region21: #{tpu_custom_call.1} parent=15 // pred_check
        %p129 = pneg %p68
      $region22: #{tpu_custom_call.1} parent=15 // pred_check_branch
        %131 = sbr.rel (%p129) target = $region24
      $region23: #{tpu_custom_call.1} parent=15 // pred_region
        %p132 = scmp.lt.s32.totalorder %s15, 1
        %s133 = scalar_select %p132, %s15, 1
        %s134 = smul.addr %s133, 8
        %s135 = scalar_lea.vmem %s1, %s134
      $region24: #{tpu_custom_call.1} parent=15 // pred_fallthru
        _
    $region16: #{tpu_custom_call.1} parent=5 // pred_fallthru
      _
    %p136 = scmp.le.s32.totalorder 1, %s8
    %p137 = scmp.lt.s32.totalorder %s8, 3
    %p138 = pnand %p136, %p137
    %p139 = pneg %p138
    // Predicated region
    $region25: #{tpu_custom_call.1} parent=5 // pred_check
      _
    $region26: #{tpu_custom_call.1} parent=5 // pred_check_branch
      %141 = sbr.rel (%p138) target = $region28
    $region27: #{tpu_custom_call.1} parent=5 // pred_region
      %s142 = ssub.s32 %s8, 1
      %p143 = scmp.lt.s32.totalorder %s17, 1
      %s144 = scalar_select %p143, %s17, 1
      %p145 = scmp.lt.s32.totalorder %s18, 0
      %s146 = scalar_select %p145, %s18, 0
      %s147 = sadd.s32 %s146, %s144
      %s148 = smul.addr %s147, 8
      %s149 = scalar_lea.vmem %s0, %s148
      %p150 = pneg %p48
      %p151 = pneg %p45
      %p152 = scmp.lt.s32.totalorder %s17, 1
      %s153 = scalar_select %p152, %s17, 1
      %s154 = smul.addr %s153, 8
      %s155 = scalar_lea.vmem %s1, %s154
      %p156 = pneg %p74
      %p157 = pneg %p71
      %p158 = pneg %p100
      %p159 = pneg %p97
      %p160 = scmp.lt.s32.totalorder %s17, 1
      %s161 = scalar_select %p160, %s17, 1
      %s162 = scalar_lea.vmem %s2, %s161
      %p163 = scmp.lt.s32.totalorder %s17, 1
      %s164 = scalar_select %p163, %s17, 1
      %p165 = scmp.lt.s32.totalorder %s18, 0
      %s166 = scalar_select %p165, %s18, 0
      %s167 = sadd.s32 %s166, %s164
      %s168 = smul.addr %s167, 8
      %s169 = scalar_lea.vmem %s0, %s168
      %p170 = scmp.lt.s32.totalorder %s17, 1
      %s171 = scalar_select %p170, %s17, 1
      %s172 = smul.addr %s171, 8
      %s173 = scalar_lea.vmem %s1, %s172
      %p174 = scmp.lt.s32.totalorder %s17, 1
      %s175 = scalar_select %p174, %s17, 1
      %s176 = scalar_lea.vmem %s2, %s175
      %p177 = scmp.eq.s32.totalorder %s18, 0
      // Predicated region
      $region29: #{tpu_custom_call.1} parent=27 // pred_check
        %p178 = pneg %p177
      $region30: #{tpu_custom_call.1} parent=27 // pred_check_branch
        %180 = sbr.rel (%p178) target = $region32
      $region31: #{tpu_custom_call.1} parent=27 // pred_region
        %vm181 = vcmask 7168
        %182 = vst.msk [vmem:[#allocation2] sm:$0xff] %vm181, -inf
        %183 = vst.msk [vmem:[#allocation3] sm:$0xff] %vm181, 0.0
        %184 = vst.msk [vmem:[#allocation4] sm:$0xff] %vm181, 0.0
      $region32: #{tpu_custom_call.1} parent=27 // pred_fallthru
        _
      %v185 = vld [vmem:[%s169] sm:$0xff]
      %v186 = vld [vmem:[%s173] sm:$0xff]
      %vm187 = vcmask 261120
      %v188 = vsel %vm187, %v185, -inf
      %189 = vmax.xlane.f32.xlu0 %v188
      %v190 = vpop.xlane.xlu0 %189
      %v191 = vld [vmem:[#allocation2] sm:$0xff]
      %v192 = vmax.f32 %v191, %v190
      %194 = vset.pattern.permute.xlu0 0
      %195 = vperm.xlu0 %194, %v192
      %v196 = vpop.permute.xlu0 %195
      %v198 = vsub.f32 %v185, %v196
      %v199 = vmul.f32 %v198, 1.442695
      %v200 = vpow.pop %v199
      %v201 = vld [vmem:[#allocation3] sm:$0xff]
      %v202 = vsub.f32 %v191, %v192
      %v203 = vmul.f32 %v202, 1.442695
      %v204 = vpow.pop %v203
      %v205 = vmul.f32 %v201, %v204
      %v206 = vsel %vm187, %v200, 0.0
      %207 = vadd.xlane.f32.xlu0 %v206
      %v208 = vpop.xlane.xlu0 %207
      %v209 = vadd.f32 %v205, %v208
      %vm210 = vcmask 7168
      %211 = vst.msk [vmem:[#allocation3] sm:$0xff] %vm210, %v209
      %212 = vst.msk [vmem:[#allocation2] sm:$0xff] %vm210, %v192
      %v213 = vlaneseq
      %v214 = vand.u32 %v213, 127
      %s215 = smul.u32 %s18, 32
      %v216 = vstv %s215
      %v217 = vadd.s32 %v214, %v216
      %218 = vset.pattern.permute.xlu0 0
      %219 = vperm.xlu0 %218, %v186
      %v220 = vpop.permute.xlu0 %219
      %vm221 = vcmp.eq.s32.totalorder %v217, %v220
      %v222 = vld [vmem:[#allocation4] sm:$0xff]
      %v223 = vsel %vm221, %v185, 0.0
      %v224 = vsel %vm187, %v223, 0.0
      %225 = vadd.xlane.f32.xlu0 %v224
      %v226 = vpop.xlane.xlu0 %225
      %v227 = vadd.f32 %v222, %v226
      %228 = vst.msk [vmem:[#allocation4] sm:$0xff] %vm210, %v227
      // Predicated region
      $region33: #{tpu_custom_call.1} parent=27 // pred_check
        %p229 = pneg %p177
      $region34: #{tpu_custom_call.1} parent=27 // pred_check_branch
        %231 = sbr.rel (%p229) target = $region36
      $region35: #{tpu_custom_call.1} parent=27 // pred_region
        %v232 = vlaneseq
        %v233 = vshrl.u32 %v232, 7
        %s234 = smul.u32 %s17, 8
        %v235 = vstv %s234
        %v236 = vadd.s32 %v233, %v235
        %vm237 = vcmp.ne.s32.totalorder %v186, 1
        %vm238 = vcmp.lt.s32.totalorder %v236, 16
        %vm239 = vmand %vm237, %vm238
        %v240 = vld [vmem:[#allocation2] sm:$0xff]
        %v241 = vld [vmem:[#allocation3] sm:$0xff]
        %v242 = vlog2.pop %v241
        %v243 = vmul.f32 %v242, 0.6931472
        %v244 = vadd.f32 %v240, %v243
        %v245 = vld [vmem:[#allocation4] sm:$0xff]
        %v246 = vsub.f32 %v244, %v245
        %v247 = vsel %vm239, %v246, 0.0
        %v248 = vsel %vm210, %v247, 0.0
        %249 = vadd.xlane.f32.xlu0 %v248
        %v250 = vpop.xlane.xlu0 %249
        %v251 = vrot.slane %v250, 4
        %v252 = vadd.f32 %v250, %v251
        %v253 = vrot.slane %v252, 2
        %v254 = vadd.f32 %v252, %v253
        %v255 = vrot.slane %v254, 1
        %v256 = vadd.f32 %v254, %v255
        %s257 = vtos %v256
        %v258 = vstv %s257
        %vm259 = vcmask 0
        %260 = vst.msk [vmem:[%s176] sm:$0x1] %vm259, %v258
      $region36: #{tpu_custom_call.1} parent=27 // pred_fallthru
        _
      %p261 = scmp.lt.s32.totalorder %s17, 1
      %s262 = scalar_select %p261, %s17, 1
      %s263 = scalar_lea.vmem %s2, %s262
      // Predicated region
      $region37: #{tpu_custom_call.1} parent=27 // pred_check
        %p264 = pneg %p97
      $region38: #{tpu_custom_call.1} parent=27 // pred_check_branch
        %266 = sbr.rel (%p264) target = $region40
      $region39: #{tpu_custom_call.1} parent=27 // pred_region
        _
      $region40: #{tpu_custom_call.1} parent=27 // pred_fallthru
        _
    $region28: #{tpu_custom_call.1} parent=5 // pred_fallthru
      _
    %p267 = scmp.le.s32.totalorder 2, %s8
    // Predicated region
    $region41: #{tpu_custom_call.1} parent=5 // pred_check
      %p268 = pneg %p267
    $region42: #{tpu_custom_call.1} parent=5 // pred_check_branch
      %270 = sbr.rel (%p268) target = $region44
    $region43: #{tpu_custom_call.1} parent=5 // pred_region
      %s271 = ssub.s32 %s8, 2
      // Predicated region
      $region45: #{tpu_custom_call.1} parent=43 // pred_check
        %p272 = pneg %p103
      $region46: #{tpu_custom_call.1} parent=43 // pred_check_branch
        %274 = sbr.rel (%p272) target = $region48
      $region47: #{tpu_custom_call.1} parent=43 // pred_region
        %p275 = scmp.lt.s32.totalorder %s19, 1
        %s276 = scalar_select %p275, %s19, 1
        %s277 = scalar_lea.vmem %s2, %s276
      $region48: #{tpu_custom_call.1} parent=43 // pred_fallthru
        _
    $region44: #{tpu_custom_call.1} parent=5 // pred_fallthru
      _
  $region6: #{tpu_custom_call.1} parent=0 // loop_footer
    %s12 = sadd.s32 1, %s8
  $region7: #{tpu_custom_call.1} parent=0 // loop_footer_branch
    %7 = sbr.rel target = $region3
  $region8: #{tpu_custom_call.1} parent=0 // loop_exit
    _

</llo_original>
